<compile_context>
chip_gen: v6e
topology: v6e:2x2x1
jax: 0.10.0
libtpu: 0.0.40
codegen_flags: <defaults>
</compile_context>

<pallas_src>
import functools
import math

import jax
import jax.numpy as jnp
from jax.experimental import pallas as pl
from jax.experimental.pallas import tpu as pltpu


def _ln4dcf_kernel(x_ref, gamma_ref, beta_ref, o_ref, *, eps, inv_n, w, k):
    """x_ref: (C, TH', k*W); gamma/beta: (C, 1, k*W).

    k original H rows are folded into the lane axis; segment j of a folded row
    (lanes [j*W, (j+1)*W)) corresponds to original row h = h'*k + j. Stats are
    reduced over C and over the W lanes of each segment.
    """
    x = x_ref[...].astype(jnp.float32)                     # (C, TH', Wp)
    th, wp = x_ref.shape[1], x_ref.shape[2]

    # Reduce over C first: plain VALU adds across vreg slabs (no XLU work).
    sum_c = jnp.sum(x, axis=0)                             # (TH', Wp)

    if k == 1:
        # W already lane-dense: one cross-lane reduce per stats pass.
        mu = jnp.sum(sum_c, axis=-1, keepdims=True) * inv_n          # (TH', 1)
        d = x - mu[None, :, :]                                       # (C, TH', Wp)
        dsq_c = jnp.sum(d * d, axis=0)                               # (TH', Wp)
        var = jnp.sum(dsq_c, axis=-1, keepdims=True) * inv_n         # (TH', 1)
        inv_std_b = jax.lax.rsqrt(var + eps)[None, :, :]             # (1, TH', 1)
    else:
        # Per-segment stats via masked cross-lane reductions on the C-reduced
        # tile (exact f32, fully VPU/XLU; k is small and static).
        lane = jax.lax.broadcasted_iota(jnp.int32, (th, wp), 1)
        mu_full = jnp.zeros((th, wp), jnp.float32)
        for j in range(k):
            m = (lane >= j * w) & (lane < (j + 1) * w)
            s_j = jnp.sum(jnp.where(m, sum_c, 0.0), axis=-1, keepdims=True)
            mu_full = jnp.where(m, s_j * inv_n, mu_full)
        d = x - mu_full[None, :, :]                                  # (C, TH', Wp)
        dsq_c = jnp.sum(d * d, axis=0)                               # (TH', Wp)
        istd_full = jnp.zeros((th, wp), jnp.float32)
        for j in range(k):
            m = (lane >= j * w) & (lane < (j + 1) * w)
            v_j = jnp.sum(jnp.where(m, dsq_c, 0.0), axis=-1,
                          keepdims=True) * inv_n
            istd_full = jnp.where(m, jax.lax.rsqrt(v_j + eps), istd_full)
        inv_std_b = istd_full[None, :, :]                            # (1, TH', Wp)

    gamma = gamma_ref[...].astype(jnp.float32)              # (C, 1, Wp)
    beta = beta_ref[...].astype(jnp.float32)                # (C, 1, Wp)
    o_ref[...] = (d * inv_std_b * gamma + beta).astype(o_ref.dtype)


def _vmem_capacity_bytes():
    try:
        return int(pltpu.get_tpu_info().vmem_capacity_bytes)
    except Exception:
        return 64 * 1024 * 1024          # conservative (v7x per-TensorCore)


def _choose_fold(h, w, max_fold=32):
    """Fold factor k: view (H, W) as (H/k, k*W) so blocks fill vreg lanes."""
    if w % 128 == 0:
        return 1
    k_target = min(128 // math.gcd(w, 128), max_fold)  # smallest k: k*W % 128 == 0
    for cand in range(k_target, 0, -1):
        if h % cand == 0:
            return cand
    return 1


def layer_normalization_4d_cf(x, gamma, beta, eps=1e-5):
    """Pallas equivalent of LayerNormalization4DCF.forward (NCHW-native)."""
    B, C, H, W = x.shape
    assert gamma.shape == (1, C, 1, W)
    assert beta.shape == (1, C, 1, W)

    # Lane-density fold (contiguous reshape in NCHW => free, no HBM copy).
    k = _choose_fold(H, W)
    Hp, Wp = H // k, W * k
    if k != 1:
        x_f = x.reshape(B, C, Hp, Wp)
        gamma_f = jnp.tile(gamma, (1, 1, 1, k))     # tiny (C*Wp floats)
        beta_f = jnp.tile(beta, (1, 1, 1, k))
    else:
        x_f, gamma_f, beta_f = x, gamma, beta

    # Per-generation VMEM budget (v5e/v6e: 128 MiB, v7x: 64 MiB per TC).
    cap = _vmem_capacity_bytes()
    if cap >= 96 * 1024 * 1024:          # v5e / v6e
        target_block_bytes = 6 * 1024 * 1024
        vmem_limit = 64 * 1024 * 1024
    else:                                 # v7x
        target_block_bytes = 4 * 1024 * 1024
        vmem_limit = 44 * 1024 * 1024

    itemsize = x.dtype.itemsize
    row_bytes = C * Wp * itemsize
    budget_rows = max(1, target_block_bytes // row_bytes)

    # H' tile: multiple of 8 or the full dim. No wrapper pad; a ragged last
    # block is handled by Pallas (OOB rows compute stats that are discarded).
    if Hp <= 8 or budget_rows >= Hp:
        thp = Hp
    else:
        thp = min(int(budget_rows), Hp)
        thp -= thp % 8
        thp = max(thp, 8)
    n_h = pl.cdiv(Hp, thp)

    # v7x has 2 TensorCores: give the ('parallel','parallel') grid >= 2 steps.
    if B * n_h < 2 and thp >= 16:
        half = (thp // 2) - ((thp // 2) % 8)
        if half >= 8:
            thp = half
            n_h = pl.cdiv(Hp, thp)

    # Footprint guard: 2x in + 2x out buffers + ~2 f32 temp blocks + gamma/beta.
    block_bytes = C * thp * Wp * itemsize
    f32_block = C * thp * Wp * 4
    est = 4 * block_bytes + 2 * f32_block + 4 * C * Wp * 4 + (2 << 20)
    if est > vmem_limit:
        vmem_limit = min(est + (4 << 20), max(cap - (8 << 20), est))
    # TODO(synk): if a single 8-row block still exceeds VMEM (very large C*W),
    # add a C-tiled "arbitrary" grid axis with partial-sum scratch.

    kernel = functools.partial(
        _ln4dcf_kernel, eps=float(eps), inv_n=1.0 / float(C * W), w=W, k=k)

    out = pl.pallas_call(
        kernel,
        out_shape=jax.ShapeDtypeStruct((B, C, Hp, Wp), x.dtype),
        grid_spec=pltpu.PrefetchScalarGridSpec(
            num_scalar_prefetch=0,
            grid=(B, n_h),
            in_specs=[
                # one (C, TH', Wp) slab per grid step; batch dim squeezed
                pl.BlockSpec((pl.Squeezed(), C, thp, Wp),
                             lambda b, h: (b, 0, h, 0)),
                # gamma / beta: full (C, 1, Wp), same block every step (resident)
                pl.BlockSpec((pl.Squeezed(), C, 1, Wp),
                             lambda b, h: (0, 0, 0, 0)),
                pl.BlockSpec((pl.Squeezed(), C, 1, Wp),
                             lambda b, h: (0, 0, 0, 0)),
            ],
            out_specs=pl.BlockSpec((pl.Squeezed(), C, thp, Wp),
                                   lambda b, h: (b, 0, h, 0)),
        ),
        compiler_params=pltpu.CompilerParams(
            dimension_semantics=("parallel", "parallel"),
            vmem_limit_bytes=int(vmem_limit),
        ),
    )(x_f, gamma_f, beta_f)

    if k != 1:
        out = out.reshape(B, C, H, W)
    return out


def _reference(x, gamma, beta, eps=1e-5):
    mu = jnp.mean(x, axis=(1, 3), keepdims=True)
    var = jnp.mean((x - mu) ** 2, axis=(1, 3), keepdims=True)
    return (x - mu) / jnp.sqrt(var + eps) * gamma + beta


if __name__ == "__main__":
    key = jax.random.PRNGKey(0)
    kx, kg, kb, kx2, kg2, kb2 = jax.random.split(key, 6)

    # Main case: W < 128 exercises the lane-density fold (k = 8 -> 128 lanes).
    B, C, H, W = 2, 4, 64, 16
    x = jax.random.normal(kx, (B, C, H, W), dtype=jnp.float32)
    # Module init is gamma=ones, beta=zeros; perturb deterministically so the
    # per-(C, W) affine broadcast is actually tested.
    gamma = 1.0 + 0.1 * jax.random.normal(kg, (1, C, 1, W), dtype=jnp.float32)
    beta = 0.1 * jax.random.normal(kb, (1, C, 1, W), dtype=jnp.float32)

    out = jax.block_until_ready(layer_normalization_4d_cf(x, gamma, beta, eps=1e-5))
    ref = _reference(x, gamma, beta, eps=1e-5)
    assert out.shape == (B, C, H, W)
    assert out.dtype == jnp.float32
    assert jnp.allclose(out, ref, atol=2e-5, rtol=2e-5), \
        float(jnp.max(jnp.abs(out - ref)))

    # Second case: W already a multiple of 128 (k = 1 fast path).
    B2, C2, H2, W2 = 1, 3, 16, 128
    x2 = jax.random.normal(kx2, (B2, C2, H2, W2), dtype=jnp.float32)
    gamma2 = 1.0 + 0.1 * jax.random.normal(kg2, (1, C2, 1, W2), dtype=jnp.float32)
    beta2 = 0.1 * jax.random.normal(kb2, (1, C2, 1, W2), dtype=jnp.float32)
    out2 = jax.block_until_ready(layer_normalization_4d_cf(x2, gamma2, beta2, eps=1e-5))
    ref2 = _reference(x2, gamma2, beta2, eps=1e-5)
    assert jnp.allclose(out2, ref2, atol=2e-5, rtol=2e-5), \
        float(jnp.max(jnp.abs(out2 - ref2)))

    print("KERNEL_OK")
</pallas_src>

<mosaic_0001>
module attributes {stable_mosaic.version = 11 : i64} {
  func.func @_ln4dcf_kernel(%arg0: i32, %arg1: i32, %arg2: memref<1x4x8x128xf32, #tpu.memory_space<vmem>>, %arg3: memref<1x4x1x128xf32, #tpu.memory_space<vmem>>, %arg4: memref<1x4x1x128xf32, #tpu.memory_space<vmem>>, %arg5: memref<1x4x8x128xf32, #tpu.memory_space<vmem>>) attributes {dimension_semantics = [#tpu.dimension_semantics<parallel>, #tpu.dimension_semantics<parallel>], iteration_bounds = array<i64: 2, 1>, scalar_prefetch = 0 : i64, scratch_operands = 0 : i64, tpu.core_type = #tpu.core_type<tc>, window_params = [{transform_indices = @transform_0, window_bounds = array<i64: 1, 4, 8, 128>}, {pipeline_mode = #tpu.pipeline_mode<synchronous>, transform_indices = @transform_1, window_bounds = array<i64: 1, 4, 1, 128>}, {pipeline_mode = #tpu.pipeline_mode<synchronous>, transform_indices = @transform_2, window_bounds = array<i64: 1, 4, 1, 128>}, {transform_indices = @transform_3, window_bounds = array<i64: 1, 4, 8, 128>}]} {
    %c0 = arith.constant 0 : index
    %c0_0 = arith.constant 0 : index
    %c0_1 = arith.constant 0 : index
    %c0_2 = arith.constant 0 : index
    %0 = vector.load %arg2[%c0, %c0_0, %c0_1, %c0_2] : memref<1x4x8x128xf32, #tpu.memory_space<vmem>>, vector<1x4x8x128xf32>
    %1 = vector.shape_cast %0 : vector<1x4x8x128xf32> to vector<4x8x128xf32>
    %cst = arith.constant dense<0.000000e+00> : vector<8x128xf32>
    %2 = vector.multi_reduction <add>, %1, %cst [0] : vector<4x8x128xf32> to vector<8x128xf32>
    %3 = tpu.iota {dimensions = array<i32: 1>} : vector<8x128xi32>
    %cst_3 = arith.constant 0.000000e+00 : f32
    %4 = vector.broadcast %cst_3 : f32 to vector<8x128xf32>
    %c0_i32 = arith.constant 0 : i32
    %5 = vector.broadcast %c0_i32 : i32 to vector<8x128xi32>
    %6 = arith.cmpi sge, %3, %5 : vector<8x128xi32>
    %c16_i32 = arith.constant 16 : i32
    %7 = vector.broadcast %c16_i32 : i32 to vector<8x128xi32>
    %8 = arith.cmpi slt, %3, %7 : vector<8x128xi32>
    %9 = arith.andi %6, %8 : vector<8x128xi1>
    %cst_4 = arith.constant 0.000000e+00 : f32
    %10 = vector.broadcast %cst_4 : f32 to vector<8x128xf32>
    %11 = arith.select %9, %2, %10 : vector<8x128xi1>, vector<8x128xf32>
    %cst_5 = arith.constant dense<0.000000e+00> : vector<8xf32>
    %12 = vector.multi_reduction <add>, %11, %cst_5 [1] : vector<8x128xf32> to vector<8xf32>
    %13 = vector.shape_cast %12 : vector<8xf32> to vector<8x1xf32>
    %cst_6 = arith.constant 1.562500e-02 : f32
    %14 = vector.broadcast %cst_6 : f32 to vector<8x1xf32>
    %15 = arith.mulf %13, %14 : vector<8x1xf32>
    %16 = vector.shape_cast %15 : vector<8x1xf32> to vector<8x1xf32>
    %17 = vector.broadcast %16 : vector<8x1xf32> to vector<8x128xf32>
    %18 = arith.select %9, %17, %4 : vector<8x128xi1>, vector<8x128xf32>
    %c16_i32_7 = arith.constant 16 : i32
    %19 = vector.broadcast %c16_i32_7 : i32 to vector<8x128xi32>
    %20 = arith.cmpi sge, %3, %19 : vector<8x128xi32>
    %c32_i32 = arith.constant 32 : i32
    %21 = vector.broadcast %c32_i32 : i32 to vector<8x128xi32>
    %22 = arith.cmpi slt, %3, %21 : vector<8x128xi32>
    %23 = arith.andi %20, %22 : vector<8x128xi1>
    %cst_8 = arith.constant 0.000000e+00 : f32
    %24 = vector.broadcast %cst_8 : f32 to vector<8x128xf32>
    %25 = arith.select %23, %2, %24 : vector<8x128xi1>, vector<8x128xf32>
    %cst_9 = arith.constant dense<0.000000e+00> : vector<8xf32>
    %26 = vector.multi_reduction <add>, %25, %cst_9 [1] : vector<8x128xf32> to vector<8xf32>
    %27 = vector.shape_cast %26 : vector<8xf32> to vector<8x1xf32>
    %cst_10 = arith.constant 1.562500e-02 : f32
    %28 = vector.broadcast %cst_10 : f32 to vector<8x1xf32>
    %29 = arith.mulf %27, %28 : vector<8x1xf32>
    %30 = vector.shape_cast %29 : vector<8x1xf32> to vector<8x1xf32>
    %31 = vector.broadcast %30 : vector<8x1xf32> to vector<8x128xf32>
    %32 = arith.select %23, %31, %18 : vector<8x128xi1>, vector<8x128xf32>
    %c32_i32_11 = arith.constant 32 : i32
    %33 = vector.broadcast %c32_i32_11 : i32 to vector<8x128xi32>
    %34 = arith.cmpi sge, %3, %33 : vector<8x128xi32>
    %c48_i32 = arith.constant 48 : i32
    %35 = vector.broadcast %c48_i32 : i32 to vector<8x128xi32>
    %36 = arith.cmpi slt, %3, %35 : vector<8x128xi32>
    %37 = arith.andi %34, %36 : vector<8x128xi1>
    %cst_12 = arith.constant 0.000000e+00 : f32
    %38 = vector.broadcast %cst_12 : f32 to vector<8x128xf32>
    %39 = arith.select %37, %2, %38 : vector<8x128xi1>, vector<8x128xf32>
    %cst_13 = arith.constant dense<0.000000e+00> : vector<8xf32>
    %40 = vector.multi_reduction <add>, %39, %cst_13 [1] : vector<8x128xf32> to vector<8xf32>
    %41 = vector.shape_cast %40 : vector<8xf32> to vector<8x1xf32>
    %cst_14 = arith.constant 1.562500e-02 : f32
    %42 = vector.broadcast %cst_14 : f32 to vector<8x1xf32>
    %43 = arith.mulf %41, %42 : vector<8x1xf32>
    %44 = vector.shape_cast %43 : vector<8x1xf32> to vector<8x1xf32>
    %45 = vector.broadcast %44 : vector<8x1xf32> to vector<8x128xf32>
    %46 = arith.select %37, %45, %32 : vector<8x128xi1>, vector<8x128xf32>
    %c48_i32_15 = arith.constant 48 : i32
    %47 = vector.broadcast %c48_i32_15 : i32 to vector<8x128xi32>
    %48 = arith.cmpi sge, %3, %47 : vector<8x128xi32>
    %c64_i32 = arith.constant 64 : i32
    %49 = vector.broadcast %c64_i32 : i32 to vector<8x128xi32>
    %50 = arith.cmpi slt, %3, %49 : vector<8x128xi32>
    %51 = arith.andi %48, %50 : vector<8x128xi1>
    %cst_16 = arith.constant 0.000000e+00 : f32
    %52 = vector.broadcast %cst_16 : f32 to vector<8x128xf32>
    %53 = arith.select %51, %2, %52 : vector<8x128xi1>, vector<8x128xf32>
    %cst_17 = arith.constant dense<0.000000e+00> : vector<8xf32>
    %54 = vector.multi_reduction <add>, %53, %cst_17 [1] : vector<8x128xf32> to vector<8xf32>
    %55 = vector.shape_cast %54 : vector<8xf32> to vector<8x1xf32>
    %cst_18 = arith.constant 1.562500e-02 : f32
    %56 = vector.broadcast %cst_18 : f32 to vector<8x1xf32>
    %57 = arith.mulf %55, %56 : vector<8x1xf32>
    %58 = vector.shape_cast %57 : vector<8x1xf32> to vector<8x1xf32>
    %59 = vector.broadcast %58 : vector<8x1xf32> to vector<8x128xf32>
    %60 = arith.select %51, %59, %46 : vector<8x128xi1>, vector<8x128xf32>
    %c64_i32_19 = arith.constant 64 : i32
    %61 = vector.broadcast %c64_i32_19 : i32 to vector<8x128xi32>
    %62 = arith.cmpi sge, %3, %61 : vector<8x128xi32>
    %c80_i32 = arith.constant 80 : i32
    %63 = vector.broadcast %c80_i32 : i32 to vector<8x128xi32>
    %64 = arith.cmpi slt, %3, %63 : vector<8x128xi32>
    %65 = arith.andi %62, %64 : vector<8x128xi1>
    %cst_20 = arith.constant 0.000000e+00 : f32
    %66 = vector.broadcast %cst_20 : f32 to vector<8x128xf32>
    %67 = arith.select %65, %2, %66 : vector<8x128xi1>, vector<8x128xf32>
    %cst_21 = arith.constant dense<0.000000e+00> : vector<8xf32>
    %68 = vector.multi_reduction <add>, %67, %cst_21 [1] : vector<8x128xf32> to vector<8xf32>
    %69 = vector.shape_cast %68 : vector<8xf32> to vector<8x1xf32>
    %cst_22 = arith.constant 1.562500e-02 : f32
    %70 = vector.broadcast %cst_22 : f32 to vector<8x1xf32>
    %71 = arith.mulf %69, %70 : vector<8x1xf32>
    %72 = vector.shape_cast %71 : vector<8x1xf32> to vector<8x1xf32>
    %73 = vector.broadcast %72 : vector<8x1xf32> to vector<8x128xf32>
    %74 = arith.select %65, %73, %60 : vector<8x128xi1>, vector<8x128xf32>
    %c80_i32_23 = arith.constant 80 : i32
    %75 = vector.broadcast %c80_i32_23 : i32 to vector<8x128xi32>
    %76 = arith.cmpi sge, %3, %75 : vector<8x128xi32>
    %c96_i32 = arith.constant 96 : i32
    %77 = vector.broadcast %c96_i32 : i32 to vector<8x128xi32>
    %78 = arith.cmpi slt, %3, %77 : vector<8x128xi32>
    %79 = arith.andi %76, %78 : vector<8x128xi1>
    %cst_24 = arith.constant 0.000000e+00 : f32
    %80 = vector.broadcast %cst_24 : f32 to vector<8x128xf32>
    %81 = arith.select %79, %2, %80 : vector<8x128xi1>, vector<8x128xf32>
    %cst_25 = arith.constant dense<0.000000e+00> : vector<8xf32>
    %82 = vector.multi_reduction <add>, %81, %cst_25 [1] : vector<8x128xf32> to vector<8xf32>
    %83 = vector.shape_cast %82 : vector<8xf32> to vector<8x1xf32>
    %cst_26 = arith.constant 1.562500e-02 : f32
    %84 = vector.broadcast %cst_26 : f32 to vector<8x1xf32>
    %85 = arith.mulf %83, %84 : vector<8x1xf32>
    %86 = vector.shape_cast %85 : vector<8x1xf32> to vector<8x1xf32>
    %87 = vector.broadcast %86 : vector<8x1xf32> to vector<8x128xf32>
    %88 = arith.select %79, %87, %74 : vector<8x128xi1>, vector<8x128xf32>
    %c96_i32_27 = arith.constant 96 : i32
    %89 = vector.broadcast %c96_i32_27 : i32 to vector<8x128xi32>
    %90 = arith.cmpi sge, %3, %89 : vector<8x128xi32>
    %c112_i32 = arith.constant 112 : i32
    %91 = vector.broadcast %c112_i32 : i32 to vector<8x128xi32>
    %92 = arith.cmpi slt, %3, %91 : vector<8x128xi32>
    %93 = arith.andi %90, %92 : vector<8x128xi1>
    %cst_28 = arith.constant 0.000000e+00 : f32
    %94 = vector.broadcast %cst_28 : f32 to vector<8x128xf32>
    %95 = arith.select %93, %2, %94 : vector<8x128xi1>, vector<8x128xf32>
    %cst_29 = arith.constant dense<0.000000e+00> : vector<8xf32>
    %96 = vector.multi_reduction <add>, %95, %cst_29 [1] : vector<8x128xf32> to vector<8xf32>
    %97 = vector.shape_cast %96 : vector<8xf32> to vector<8x1xf32>
    %cst_30 = arith.constant 1.562500e-02 : f32
    %98 = vector.broadcast %cst_30 : f32 to vector<8x1xf32>
    %99 = arith.mulf %97, %98 : vector<8x1xf32>
    %100 = vector.shape_cast %99 : vector<8x1xf32> to vector<8x1xf32>
    %101 = vector.broadcast %100 : vector<8x1xf32> to vector<8x128xf32>
    %102 = arith.select %93, %101, %88 : vector<8x128xi1>, vector<8x128xf32>
    %c112_i32_31 = arith.constant 112 : i32
    %103 = vector.broadcast %c112_i32_31 : i32 to vector<8x128xi32>
    %104 = arith.cmpi sge, %3, %103 : vector<8x128xi32>
    %c128_i32 = arith.constant 128 : i32
    %105 = vector.broadcast %c128_i32 : i32 to vector<8x128xi32>
    %106 = arith.cmpi slt, %3, %105 : vector<8x128xi32>
    %107 = arith.andi %104, %106 : vector<8x128xi1>
    %cst_32 = arith.constant 0.000000e+00 : f32
    %108 = vector.broadcast %cst_32 : f32 to vector<8x128xf32>
    %109 = arith.select %107, %2, %108 : vector<8x128xi1>, vector<8x128xf32>
    %cst_33 = arith.constant dense<0.000000e+00> : vector<8xf32>
    %110 = vector.multi_reduction <add>, %109, %cst_33 [1] : vector<8x128xf32> to vector<8xf32>
    %111 = vector.shape_cast %110 : vector<8xf32> to vector<8x1xf32>
    %cst_34 = arith.constant 1.562500e-02 : f32
    %112 = vector.broadcast %cst_34 : f32 to vector<8x1xf32>
    %113 = arith.mulf %111, %112 : vector<8x1xf32>
    %114 = vector.shape_cast %113 : vector<8x1xf32> to vector<8x1xf32>
    %115 = vector.broadcast %114 : vector<8x1xf32> to vector<8x128xf32>
    %116 = arith.select %107, %115, %102 : vector<8x128xi1>, vector<8x128xf32>
    %117 = vector.shape_cast %116 : vector<8x128xf32> to vector<1x8x128xf32>
    %118 = vector.broadcast %117 : vector<1x8x128xf32> to vector<4x8x128xf32>
    %119 = arith.subf %1, %118 : vector<4x8x128xf32>
    %120 = arith.mulf %119, %119 : vector<4x8x128xf32>
    %cst_35 = arith.constant dense<0.000000e+00> : vector<8x128xf32>
    %121 = vector.multi_reduction <add>, %120, %cst_35 [0] : vector<4x8x128xf32> to vector<8x128xf32>
    %cst_36 = arith.constant 0.000000e+00 : f32
    %122 = vector.broadcast %cst_36 : f32 to vector<8x128xf32>
    %c0_i32_37 = arith.constant 0 : i32
    %123 = vector.broadcast %c0_i32_37 : i32 to vector<8x128xi32>
    %124 = arith.cmpi sge, %3, %123 : vector<8x128xi32>
    %c16_i32_38 = arith.constant 16 : i32
    %125 = vector.broadcast %c16_i32_38 : i32 to vector<8x128xi32>
    %126 = arith.cmpi slt, %3, %125 : vector<8x128xi32>
    %127 = arith.andi %124, %126 : vector<8x128xi1>
    %cst_39 = arith.constant 0.000000e+00 : f32
    %128 = vector.broadcast %cst_39 : f32 to vector<8x128xf32>
    %129 = arith.select %127, %121, %128 : vector<8x128xi1>, vector<8x128xf32>
    %cst_40 = arith.constant dense<0.000000e+00> : vector<8xf32>
    %130 = vector.multi_reduction <add>, %129, %cst_40 [1] : vector<8x128xf32> to vector<8xf32>
    %131 = vector.shape_cast %130 : vector<8xf32> to vector<8x1xf32>
    %cst_41 = arith.constant 1.562500e-02 : f32
    %132 = vector.broadcast %cst_41 : f32 to vector<8x1xf32>
    %133 = arith.mulf %131, %132 : vector<8x1xf32>
    %cst_42 = arith.constant 9.99999974E-6 : f32
    %134 = vector.broadcast %cst_42 : f32 to vector<8x1xf32>
    %135 = arith.addf %133, %134 : vector<8x1xf32>
    %136 = math.rsqrt %135 : vector<8x1xf32>
    %137 = vector.shape_cast %136 : vector<8x1xf32> to vector<8x1xf32>
    %138 = vector.broadcast %137 : vector<8x1xf32> to vector<8x128xf32>
    %139 = arith.select %127, %138, %122 : vector<8x128xi1>, vector<8x128xf32>
    %c16_i32_43 = arith.constant 16 : i32
    %140 = vector.broadcast %c16_i32_43 : i32 to vector<8x128xi32>
    %141 = arith.cmpi sge, %3, %140 : vector<8x128xi32>
    %c32_i32_44 = arith.constant 32 : i32
    %142 = vector.broadcast %c32_i32_44 : i32 to vector<8x128xi32>
    %143 = arith.cmpi slt, %3, %142 : vector<8x128xi32>
    %144 = arith.andi %141, %143 : vector<8x128xi1>
    %cst_45 = arith.constant 0.000000e+00 : f32
    %145 = vector.broadcast %cst_45 : f32 to vector<8x128xf32>
    %146 = arith.select %144, %121, %145 : vector<8x128xi1>, vector<8x128xf32>
    %cst_46 = arith.constant dense<0.000000e+00> : vector<8xf32>
    %147 = vector.multi_reduction <add>, %146, %cst_46 [1] : vector<8x128xf32> to vector<8xf32>
    %148 = vector.shape_cast %147 : vector<8xf32> to vector<8x1xf32>
    %cst_47 = arith.constant 1.562500e-02 : f32
    %149 = vector.broadcast %cst_47 : f32 to vector<8x1xf32>
    %150 = arith.mulf %148, %149 : vector<8x1xf32>
    %cst_48 = arith.constant 9.99999974E-6 : f32
    %151 = vector.broadcast %cst_48 : f32 to vector<8x1xf32>
    %152 = arith.addf %150, %151 : vector<8x1xf32>
    %153 = math.rsqrt %152 : vector<8x1xf32>
    %154 = vector.shape_cast %153 : vector<8x1xf32> to vector<8x1xf32>
    %155 = vector.broadcast %154 : vector<8x1xf32> to vector<8x128xf32>
    %156 = arith.select %144, %155, %139 : vector<8x128xi1>, vector<8x128xf32>
    %c32_i32_49 = arith.constant 32 : i32
    %157 = vector.broadcast %c32_i32_49 : i32 to vector<8x128xi32>
    %158 = arith.cmpi sge, %3, %157 : vector<8x128xi32>
    %c48_i32_50 = arith.constant 48 : i32
    %159 = vector.broadcast %c48_i32_50 : i32 to vector<8x128xi32>
    %160 = arith.cmpi slt, %3, %159 : vector<8x128xi32>
    %161 = arith.andi %158, %160 : vector<8x128xi1>
    %cst_51 = arith.constant 0.000000e+00 : f32
    %162 = vector.broadcast %cst_51 : f32 to vector<8x128xf32>
    %163 = arith.select %161, %121, %162 : vector<8x128xi1>, vector<8x128xf32>
    %cst_52 = arith.constant dense<0.000000e+00> : vector<8xf32>
    %164 = vector.multi_reduction <add>, %163, %cst_52 [1] : vector<8x128xf32> to vector<8xf32>
    %165 = vector.shape_cast %164 : vector<8xf32> to vector<8x1xf32>
    %cst_53 = arith.constant 1.562500e-02 : f32
    %166 = vector.broadcast %cst_53 : f32 to vector<8x1xf32>
    %167 = arith.mulf %165, %166 : vector<8x1xf32>
    %cst_54 = arith.constant 9.99999974E-6 : f32
    %168 = vector.broadcast %cst_54 : f32 to vector<8x1xf32>
    %169 = arith.addf %167, %168 : vector<8x1xf32>
    %170 = math.rsqrt %169 : vector<8x1xf32>
    %171 = vector.shape_cast %170 : vector<8x1xf32> to vector<8x1xf32>
    %172 = vector.broadcast %171 : vector<8x1xf32> to vector<8x128xf32>
    %173 = arith.select %161, %172, %156 : vector<8x128xi1>, vector<8x128xf32>
    %c48_i32_55 = arith.constant 48 : i32
    %174 = vector.broadcast %c48_i32_55 : i32 to vector<8x128xi32>
    %175 = arith.cmpi sge, %3, %174 : vector<8x128xi32>
    %c64_i32_56 = arith.constant 64 : i32
    %176 = vector.broadcast %c64_i32_56 : i32 to vector<8x128xi32>
    %177 = arith.cmpi slt, %3, %176 : vector<8x128xi32>
    %178 = arith.andi %175, %177 : vector<8x128xi1>
    %cst_57 = arith.constant 0.000000e+00 : f32
    %179 = vector.broadcast %cst_57 : f32 to vector<8x128xf32>
    %180 = arith.select %178, %121, %179 : vector<8x128xi1>, vector<8x128xf32>
    %cst_58 = arith.constant dense<0.000000e+00> : vector<8xf32>
    %181 = vector.multi_reduction <add>, %180, %cst_58 [1] : vector<8x128xf32> to vector<8xf32>
    %182 = vector.shape_cast %181 : vector<8xf32> to vector<8x1xf32>
    %cst_59 = arith.constant 1.562500e-02 : f32
    %183 = vector.broadcast %cst_59 : f32 to vector<8x1xf32>
    %184 = arith.mulf %182, %183 : vector<8x1xf32>
    %cst_60 = arith.constant 9.99999974E-6 : f32
    %185 = vector.broadcast %cst_60 : f32 to vector<8x1xf32>
    %186 = arith.addf %184, %185 : vector<8x1xf32>
    %187 = math.rsqrt %186 : vector<8x1xf32>
    %188 = vector.shape_cast %187 : vector<8x1xf32> to vector<8x1xf32>
    %189 = vector.broadcast %188 : vector<8x1xf32> to vector<8x128xf32>
    %190 = arith.select %178, %189, %173 : vector<8x128xi1>, vector<8x128xf32>
    %c64_i32_61 = arith.constant 64 : i32
    %191 = vector.broadcast %c64_i32_61 : i32 to vector<8x128xi32>
    %192 = arith.cmpi sge, %3, %191 : vector<8x128xi32>
    %c80_i32_62 = arith.constant 80 : i32
    %193 = vector.broadcast %c80_i32_62 : i32 to vector<8x128xi32>
    %194 = arith.cmpi slt, %3, %193 : vector<8x128xi32>
    %195 = arith.andi %192, %194 : vector<8x128xi1>
    %cst_63 = arith.constant 0.000000e+00 : f32
    %196 = vector.broadcast %cst_63 : f32 to vector<8x128xf32>
    %197 = arith.select %195, %121, %196 : vector<8x128xi1>, vector<8x128xf32>
    %cst_64 = arith.constant dense<0.000000e+00> : vector<8xf32>
    %198 = vector.multi_reduction <add>, %197, %cst_64 [1] : vector<8x128xf32> to vector<8xf32>
    %199 = vector.shape_cast %198 : vector<8xf32> to vector<8x1xf32>
    %cst_65 = arith.constant 1.562500e-02 : f32
    %200 = vector.broadcast %cst_65 : f32 to vector<8x1xf32>
    %201 = arith.mulf %199, %200 : vector<8x1xf32>
    %cst_66 = arith.constant 9.99999974E-6 : f32
    %202 = vector.broadcast %cst_66 : f32 to vector<8x1xf32>
    %203 = arith.addf %201, %202 : vector<8x1xf32>
    %204 = math.rsqrt %203 : vector<8x1xf32>
    %205 = vector.shape_cast %204 : vector<8x1xf32> to vector<8x1xf32>
    %206 = vector.broadcast %205 : vector<8x1xf32> to vector<8x128xf32>
    %207 = arith.select %195, %206, %190 : vector<8x128xi1>, vector<8x128xf32>
    %c80_i32_67 = arith.constant 80 : i32
    %208 = vector.broadcast %c80_i32_67 : i32 to vector<8x128xi32>
    %209 = arith.cmpi sge, %3, %208 : vector<8x128xi32>
    %c96_i32_68 = arith.constant 96 : i32
    %210 = vector.broadcast %c96_i32_68 : i32 to vector<8x128xi32>
    %211 = arith.cmpi slt, %3, %210 : vector<8x128xi32>
    %212 = arith.andi %209, %211 : vector<8x128xi1>
    %cst_69 = arith.constant 0.000000e+00 : f32
    %213 = vector.broadcast %cst_69 : f32 to vector<8x128xf32>
    %214 = arith.select %212, %121, %213 : vector<8x128xi1>, vector<8x128xf32>
    %cst_70 = arith.constant dense<0.000000e+00> : vector<8xf32>
    %215 = vector.multi_reduction <add>, %214, %cst_70 [1] : vector<8x128xf32> to vector<8xf32>
    %216 = vector.shape_cast %215 : vector<8xf32> to vector<8x1xf32>
    %cst_71 = arith.constant 1.562500e-02 : f32
    %217 = vector.broadcast %cst_71 : f32 to vector<8x1xf32>
    %218 = arith.mulf %216, %217 : vector<8x1xf32>
    %cst_72 = arith.constant 9.99999974E-6 : f32
    %219 = vector.broadcast %cst_72 : f32 to vector<8x1xf32>
    %220 = arith.addf %218, %219 : vector<8x1xf32>
    %221 = math.rsqrt %220 : vector<8x1xf32>
    %222 = vector.shape_cast %221 : vector<8x1xf32> to vector<8x1xf32>
    %223 = vector.broadcast %222 : vector<8x1xf32> to vector<8x128xf32>
    %224 = arith.select %212, %223, %207 : vector<8x128xi1>, vector<8x128xf32>
    %c96_i32_73 = arith.constant 96 : i32
    %225 = vector.broadcast %c96_i32_73 : i32 to vector<8x128xi32>
    %226 = arith.cmpi sge, %3, %225 : vector<8x128xi32>
    %c112_i32_74 = arith.constant 112 : i32
    %227 = vector.broadcast %c112_i32_74 : i32 to vector<8x128xi32>
    %228 = arith.cmpi slt, %3, %227 : vector<8x128xi32>
    %229 = arith.andi %226, %228 : vector<8x128xi1>
    %cst_75 = arith.constant 0.000000e+00 : f32
    %230 = vector.broadcast %cst_75 : f32 to vector<8x128xf32>
    %231 = arith.select %229, %121, %230 : vector<8x128xi1>, vector<8x128xf32>
    %cst_76 = arith.constant dense<0.000000e+00> : vector<8xf32>
    %232 = vector.multi_reduction <add>, %231, %cst_76 [1] : vector<8x128xf32> to vector<8xf32>
    %233 = vector.shape_cast %232 : vector<8xf32> to vector<8x1xf32>
    %cst_77 = arith.constant 1.562500e-02 : f32
    %234 = vector.broadcast %cst_77 : f32 to vector<8x1xf32>
    %235 = arith.mulf %233, %234 : vector<8x1xf32>
    %cst_78 = arith.constant 9.99999974E-6 : f32
    %236 = vector.broadcast %cst_78 : f32 to vector<8x1xf32>
    %237 = arith.addf %235, %236 : vector<8x1xf32>
    %238 = math.rsqrt %237 : vector<8x1xf32>
    %239 = vector.shape_cast %238 : vector<8x1xf32> to vector<8x1xf32>
    %240 = vector.broadcast %239 : vector<8x1xf32> to vector<8x128xf32>
    %241 = arith.select %229, %240, %224 : vector<8x128xi1>, vector<8x128xf32>
    %c112_i32_79 = arith.constant 112 : i32
    %242 = vector.broadcast %c112_i32_79 : i32 to vector<8x128xi32>
    %243 = arith.cmpi sge, %3, %242 : vector<8x128xi32>
    %c128_i32_80 = arith.constant 128 : i32
    %244 = vector.broadcast %c128_i32_80 : i32 to vector<8x128xi32>
    %245 = arith.cmpi slt, %3, %244 : vector<8x128xi32>
    %246 = arith.andi %243, %245 : vector<8x128xi1>
    %cst_81 = arith.constant 0.000000e+00 : f32
    %247 = vector.broadcast %cst_81 : f32 to vector<8x128xf32>
    %248 = arith.select %246, %121, %247 : vector<8x128xi1>, vector<8x128xf32>
    %cst_82 = arith.constant dense<0.000000e+00> : vector<8xf32>
    %249 = vector.multi_reduction <add>, %248, %cst_82 [1] : vector<8x128xf32> to vector<8xf32>
    %250 = vector.shape_cast %249 : vector<8xf32> to vector<8x1xf32>
    %cst_83 = arith.constant 1.562500e-02 : f32
    %251 = vector.broadcast %cst_83 : f32 to vector<8x1xf32>
    %252 = arith.mulf %250, %251 : vector<8x1xf32>
    %cst_84 = arith.constant 9.99999974E-6 : f32
    %253 = vector.broadcast %cst_84 : f32 to vector<8x1xf32>
    %254 = arith.addf %252, %253 : vector<8x1xf32>
    %255 = math.rsqrt %254 : vector<8x1xf32>
    %256 = vector.shape_cast %255 : vector<8x1xf32> to vector<8x1xf32>
    %257 = vector.broadcast %256 : vector<8x1xf32> to vector<8x128xf32>
    %258 = arith.select %246, %257, %241 : vector<8x128xi1>, vector<8x128xf32>
    %259 = vector.shape_cast %258 : vector<8x128xf32> to vector<1x8x128xf32>
    %c0_85 = arith.constant 0 : index
    %c0_86 = arith.constant 0 : index
    %c0_87 = arith.constant 0 : index
    %c0_88 = arith.constant 0 : index
    %260 = vector.load %arg3[%c0_85, %c0_86, %c0_87, %c0_88] : memref<1x4x1x128xf32, #tpu.memory_space<vmem>>, vector<1x4x1x128xf32>
    %261 = vector.shape_cast %260 : vector<1x4x1x128xf32> to vector<4x1x128xf32>
    %c0_89 = arith.constant 0 : index
    %c0_90 = arith.constant 0 : index
    %c0_91 = arith.constant 0 : index
    %c0_92 = arith.constant 0 : index
    %262 = vector.load %arg4[%c0_89, %c0_90, %c0_91, %c0_92] : memref<1x4x1x128xf32, #tpu.memory_space<vmem>>, vector<1x4x1x128xf32>
    %263 = vector.shape_cast %262 : vector<1x4x1x128xf32> to vector<4x1x128xf32>
    %264 = vector.broadcast %259 : vector<1x8x128xf32> to vector<4x8x128xf32>
    %265 = arith.mulf %119, %264 : vector<4x8x128xf32>
    %266 = vector.broadcast %261 : vector<4x1x128xf32> to vector<4x8x128xf32>
    %267 = arith.mulf %265, %266 : vector<4x8x128xf32>
    %268 = vector.broadcast %263 : vector<4x1x128xf32> to vector<4x8x128xf32>
    %269 = arith.addf %267, %268 : vector<4x8x128xf32>
    %c0_93 = arith.constant 0 : index
    %c0_94 = arith.constant 0 : index
    %c0_95 = arith.constant 0 : index
    %c0_96 = arith.constant 0 : index
    %270 = vector.load %arg5[%c0_93, %c0_94, %c0_95, %c0_96] : memref<1x4x8x128xf32, #tpu.memory_space<vmem>>, vector<1x4x8x128xf32>
    %271 = vector.shape_cast %270 : vector<1x4x8x128xf32> to vector<4x8x128xf32>
    %272 = vector.shape_cast %269 : vector<4x8x128xf32> to vector<1x4x8x128xf32>
    tpu.vector_store %arg5[%c0_93, %c0_94, %c0_95, %c0_96], %272 {strides = array<i32>} : memref<1x4x8x128xf32, #tpu.memory_space<vmem>>, vector<1x4x8x128xf32>,
    return
  }
  func.func @transform_0(%arg0: i32, %arg1: i32) -> (i32, i32, i32, i32) {
    %c0_i32 = arith.constant 0 : i32
    %c0_i32_0 = arith.constant 0 : i32
    %c0_i32_1 = arith.constant 0 : i32
    return %arg0, %c0_i32, %arg1, %c0_i32_0 : i32, i32, i32, i32
  }
  func.func @transform_1(%arg0: i32, %arg1: i32) -> (i32, i32, i32, i32) {
    %c0_i32 = arith.constant 0 : i32
    %c0_i32_0 = arith.constant 0 : i32
    %c0_i32_1 = arith.constant 0 : i32
    %c0_i32_2 = arith.constant 0 : i32
    %c0_i32_3 = arith.constant 0 : i32
    return %c0_i32, %c0_i32_0, %c0_i32_1, %c0_i32_2 : i32, i32, i32, i32
  }
  func.func @transform_2(%arg0: i32, %arg1: i32) -> (i32, i32, i32, i32) {
    %c0_i32 = arith.constant 0 : i32
    %c0_i32_0 = arith.constant 0 : i32
    %c0_i32_1 = arith.constant 0 : i32
    %c0_i32_2 = arith.constant 0 : i32
    %c0_i32_3 = arith.constant 0 : i32
    return %c0_i32, %c0_i32_0, %c0_i32_1, %c0_i32_2 : i32, i32, i32, i32
  }
  func.func @transform_3(%arg0: i32, %arg1: i32) -> (i32, i32, i32, i32) {
    %c0_i32 = arith.constant 0 : i32
    %c0_i32_0 = arith.constant 0 : i32
    %c0_i32_1 = arith.constant 0 : i32
    return %arg0, %c0_i32, %arg1, %c0_i32_0 : i32, i32, i32, i32
  }
}

</mosaic_0001>

<llo_original>
// kernel: tpu_custom_call.1
$region0: #{tpu_custom_call.1}
  #allocation0 [shape = 'u32[]', space=smem, size = 0x4, offset = 0x4, fixed_abs, tag = 'smem constant byte address 0x4 - core index']
  #allocation1 [shape = 'u32[144,128]{1,0:T(1,128)}', space=vmem, size = 0x12000, scoped, tag = 'internal scratch']
  %s0 = inlined_call_operand.hbm [shape: f32[2,4,8,128], index: 0, kind: input, shape index: {}]
  %s1 = inlined_call_operand.hbm [shape: f32[1,4,1,128], index: 1, kind: input, shape index: {}]
  %s2 = inlined_call_operand.hbm [shape: f32[1,4,1,128], index: 2, kind: input, shape index: {}]
  %s3 = inlined_call_operand.hbm [shape: f32[2,4,8,128], index: 3, kind: output, shape index: {}]
  %s4 = sld [smem:[#allocation0]]
  $region57: #{tpu_custom_call.1} parent=0
    _
  %s6 = ssub.s32 1, %s4
  %s7 = scalar_select 0, %s6, %s4
  $region1: #{tpu_custom_call.1} parent=0
    #allocation2 [shape = 'u8[32768]{0}', space=vmem, size = 0x8000, scoped, tag = 'input window, operand 0']
    #allocation3 [shape = 's32[2]{0}', space=sflag, size = 0x8, scoped, tag = 'scoped memory for tpu_custom_call.1']
    #allocation4 [shape = 's32[2]{0}', space=sflag, size = 0x8, scoped, tag = 'scoped memory for tpu_custom_call.1']
    #allocation5 [shape = 'u8[2048]{0}', space=vmem, size = 0x800, scoped, tag = 'input window, operand 1, single buffered']
    #allocation6 [shape = 's32[1]{0}', space=sflag, size = 0x4, scoped, tag = 'scoped memory for tpu_custom_call.1']
    #allocation7 [shape = 'u8[2048]{0}', space=vmem, size = 0x800, scoped, tag = 'input window, operand 2, single buffered']
    #allocation8 [shape = 'u8[32768]{0}', space=vmem, size = 0x8000, scoped, tag = 'output window, operand 0']
    %8 = vsyncpa [#allocation3], 0
    %s9 = scalar_lea.sflag [#allocation3], 1
    %10 = vsyncpa %s9, 0
    %11 = vsyncpa [#allocation6], 0
    %12 = vsyncpa [#allocation4], 0
    %s13 = scalar_lea.sflag [#allocation4], 1
    %14 = vsyncpa %s13, 0
    loop: start=0, step=1, limit=4
    $region2: #{tpu_custom_call.1} parent=1 // loop_pre_header
      _
    $region3: #{tpu_custom_call.1} parent=1 // loop_header
      %s16 = sphi 0, %s20
      %p17 = scmp.ge.s32.totalorder %s16, 4
      %s23 = sphi 0, %s35
      %s24 = sphi 0, %s31
      %s25 = sphi 0, %s23
      %s26 = sphi 0, %s24
      %s27 = sphi 0, %s25
      %s28 = sphi 0, %s26
      %s40 = sphi 0, %s42
      %s43 = sphi 0, %s40
      %s44 = sphi 0, %s43
      %s60 = sphi 0, %s44
      %s64 = sphi 0, %s64
      %s66 = sphi 0, %s64
      %s67 = sphi 0, %s66
      %s81 = sphi 0, %s67
      %s85 = sphi 0, %s85
      %s87 = sphi 0, %s85
      %s88 = sphi 0, %s87
      %s102 = sphi 0, %s88
      %s110 = sphi 0, %s112
      %s113 = sphi 0, %s110
      %s114 = sphi 0, %s113
      %s130 = sphi 0, %s114
    $region4: #{tpu_custom_call.1} parent=1 // loop_header_branch
      %19 = sbr.rel (%p17) target = $region8
    $region5: #{tpu_custom_call.1} parent=1 // loop_body
      %s21 = ssub.s32 %s16, 1
      %s22 = ssub.s32 %s16, 2
      %s29 = sadd.s32 1, %s24
      %p30 = scmp.ge.s32.totalorder %s29, 1
      %s31 = scalar_select %p30, 0, %s29
      %s32 = sadd.s32 1, %s23
      %s33 = scalar_select %p30, %s32, %s23
      %p34 = scmp.ge.s32.totalorder %s33, 2
      %s35 = scalar_select %p34, 0, %s33
      %s36 = ssub.s32 %s23, %s35
      %s37 = ssub.s32 %s24, %s31
      %s38 = sor.u32 %s36, %s37
      %p39 = scmp.eq.s32.totalorder %s38, 0
      %s41 = sadd.s32 %s40, 1
      %s42 = scalar_select %p39, %s40, %s41
      %p45 = pneg %p39
      %p46 = scmp.eq.s32.totalorder %s16, 1
      %p47 = por %p45, %p46
      %p48 = scmp.ne.s32.totalorder %s40, %s43
      %p49 = scmp.eq.s32.totalorder %s16, 0
      %p50 = por %p48, %p49
      %p51 = scmp.ne.s32.totalorder %s40, %s43
      %p52 = scmp.eq.s32.totalorder %s21, 1
      %p53 = por %p51, %p52
      %p54 = scmp.ne.s32.totalorder %s43, %s44
      %p55 = scmp.eq.s32.totalorder %s21, 0
      %p56 = por %p54, %p55
      %p57 = scmp.ne.s32.totalorder %s43, %s44
      %p58 = scmp.eq.s32.totalorder %s22, 1
      %p59 = por %p57, %p58
      %p61 = scmp.ne.s32.totalorder %s44, %s60
      %p62 = scmp.eq.s32.totalorder %s22, 0
      %p63 = por %p61, %p62
      %s65 = sadd.s32 %s64, 1
      %p68 = scmp.eq.s32.totalorder %s16, 1
      %p69 = scmp.ne.s32.totalorder %s64, %s66
      %p70 = scmp.eq.s32.totalorder %s16, 0
      %p71 = por %p69, %p70
      %p72 = scmp.ne.s32.totalorder %s64, %s66
      %p73 = scmp.eq.s32.totalorder %s21, 1
      %p74 = por %p72, %p73
      %p75 = scmp.ne.s32.totalorder %s66, %s67
      %p76 = scmp.eq.s32.totalorder %s21, 0
      %p77 = por %p75, %p76
      %p78 = scmp.ne.s32.totalorder %s66, %s67
      %p79 = scmp.eq.s32.totalorder %s22, 1
      %p80 = por %p78, %p79
      %p82 = scmp.ne.s32.totalorder %s67, %s81
      %p83 = scmp.eq.s32.totalorder %s22, 0
      %p84 = por %p82, %p83
      %s86 = sadd.s32 %s85, 1
      %p89 = scmp.eq.s32.totalorder %s16, 1
      %p90 = scmp.ne.s32.totalorder %s85, %s87
      %p91 = scmp.eq.s32.totalorder %s16, 0
      %p92 = por %p90, %p91
      %p93 = scmp.ne.s32.totalorder %s85, %s87
      %p94 = scmp.eq.s32.totalorder %s21, 1
      %p95 = por %p93, %p94
      %p96 = scmp.ne.s32.totalorder %s87, %s88
      %p97 = scmp.eq.s32.totalorder %s21, 0
      %p98 = por %p96, %p97
      %p99 = scmp.ne.s32.totalorder %s87, %s88
      %p100 = scmp.eq.s32.totalorder %s22, 1
      %p101 = por %p99, %p100
      %p103 = scmp.ne.s32.totalorder %s88, %s102
      %p104 = scmp.eq.s32.totalorder %s22, 0
      %p105 = por %p103, %p104
      %s106 = ssub.s32 %s23, %s35
      %s107 = ssub.s32 %s24, %s31
      %s108 = sor.u32 %s106, %s107
      %p109 = scmp.eq.s32.totalorder %s108, 0
      %s111 = sadd.s32 %s110, 1
      %s112 = scalar_select %p109, %s110, %s111
      %p115 = pneg %p109
      %p116 = scmp.eq.s32.totalorder %s16, 1
      %p117 = por %p115, %p116
      %p118 = scmp.ne.s32.totalorder %s110, %s113
      %p119 = scmp.eq.s32.totalorder %s16, 0
      %p120 = por %p118, %p119
      %p121 = scmp.ne.s32.totalorder %s110, %s113
      %p122 = scmp.eq.s32.totalorder %s21, 1
      %p123 = por %p121, %p122
      %p124 = scmp.ne.s32.totalorder %s113, %s114
      %p125 = scmp.eq.s32.totalorder %s21, 0
      %p126 = por %p124, %p125
      %p127 = scmp.ne.s32.totalorder %s113, %s114
      %p128 = scmp.eq.s32.totalorder %s22, 1
      %p129 = por %p127, %p128
      %p131 = scmp.ne.s32.totalorder %s114, %s130
      %p132 = scmp.eq.s32.totalorder %s22, 0
      %p133 = por %p131, %p132
      %p134 = scmp.le.s32.totalorder 1, %s16
      %p135 = scmp.lt.s32.totalorder %s16, 3
      %p136 = pnand %p134, %p135
      %p137 = pneg %p136
      // Predicated region
      $region9: #{tpu_custom_call.1} parent=5 // pred_check
        _
      $region10: #{tpu_custom_call.1} parent=5 // pred_check_branch
        %139 = sbr.rel (%p136) target = $region12
      $region11: #{tpu_custom_call.1} parent=5 // pred_region
        %s140 = ssub.s32 %s16, 1
        // Predicated region
        $region13: #{tpu_custom_call.1} parent=11 // pred_check
          %p141 = pneg %p77
        $region14: #{tpu_custom_call.1} parent=11 // pred_check_branch
          %143 = sbr.rel (%p141) target = $region16
        $region15: #{tpu_custom_call.1} parent=11 // pred_region
          %s145 = ssub.s32 64, 64
          %146 = vsyncadd [#allocation6], %s145
          %s147 = sshll.u32 [#allocation5], 4
          %s148 = int_to_ptr.vmem [resolvable:$true] %s147
          %153 = dma.hbm_to_vmem [thread:$0]  %s1, 64, %s148, [#allocation6], 16, 16, 1
        $region16: #{tpu_custom_call.1} parent=11 // pred_fallthru
          _
        // Predicated region
        $region17: #{tpu_custom_call.1} parent=11 // pred_check
          %p154 = pneg %p98
        $region18: #{tpu_custom_call.1} parent=11 // pred_check_branch
          %156 = sbr.rel (%p154) target = $region20
        $region19: #{tpu_custom_call.1} parent=11 // pred_region
          %s158 = ssub.s32 64, 64
          %159 = vsyncadd [#allocation6], %s158
          %s160 = sshll.u32 [#allocation7], 4
          %s161 = int_to_ptr.vmem [resolvable:$true] %s160
          %166 = dma.hbm_to_vmem [thread:$0]  %s2, 64, %s161, [#allocation6], 16, 16, 1
        $region20: #{tpu_custom_call.1} parent=11 // pred_fallthru
          _
      $region12: #{tpu_custom_call.1} parent=5 // pred_fallthru
        _
      %p167 = scmp.lt.s32.totalorder %s16, 2
      // Predicated region
      $region21: #{tpu_custom_call.1} parent=5 // pred_check
        %p168 = pneg %p167
      $region22: #{tpu_custom_call.1} parent=5 // pred_check_branch
        %170 = sbr.rel (%p168) target = $region24
      $region23: #{tpu_custom_call.1} parent=5 // pred_region
        // Predicated region
        $region25: #{tpu_custom_call.1} parent=23 // pred_check
          %p171 = pneg %p50
        $region26: #{tpu_custom_call.1} parent=23 // pred_check_branch
          %173 = sbr.rel (%p171) target = $region28
        $region27: #{tpu_custom_call.1} parent=23 // pred_region
          %s174 = sand.u32 %s40, 1
          %s175 = scalar_lea.sflag [#allocation3], %s174
          %s176 = sand.u32 %s40, 1
          %s177 = smul.addr %s176, 32
          %s178 = scalar_lea.vmem [#allocation2], %s177
          %s180 = ssub.s32 512, 512
          %181 = vsyncadd %s175, %s180
          %s182 = smul.addr %s23, 4
          %s183 = sadd.s32 %s24, %s182
          %s184 = smul.addr %s183, 128
          %s185 = scalar_lea.hbm %s0, %s184
          %s186 = sshll.u32 %s178, 4
          %s187 = int_to_ptr.vmem [resolvable:$true] %s186
          %192 = dma.hbm_to_vmem [thread:$0]  %s185, 512, %s187, %s175, 128, 128, 8
        $region28: #{tpu_custom_call.1} parent=23 // pred_fallthru
          _
      $region24: #{tpu_custom_call.1} parent=5 // pred_fallthru
        _
      %p193 = scmp.le.s32.totalorder 1, %s16
      %p194 = scmp.lt.s32.totalorder %s16, 3
      %p195 = pnand %p193, %p194
      %p196 = pneg %p195
      // Predicated region
      $region29: #{tpu_custom_call.1} parent=5 // pred_check
        _
      $region30: #{tpu_custom_call.1} parent=5 // pred_check_branch
        %198 = sbr.rel (%p195) target = $region32
      $region31: #{tpu_custom_call.1} parent=5 // pred_region
        %s199 = ssub.s32 %s16, 1
        %s200 = sand.u32 %s43, 1
        %s201 = scalar_lea.sflag [#allocation3], %s200
        %s202 = sand.u32 %s43, 1
        %s203 = smul.addr %s202, 32
        %s204 = scalar_lea.vmem [#allocation2], %s203
        // Predicated region
        $region33: #{tpu_custom_call.1} parent=31 // pred_check
          %p205 = pneg %p56
        $region34: #{tpu_custom_call.1} parent=31 // pred_check_branch
          %207 = sbr.rel (%p205) target = $region36
        $region35: #{tpu_custom_call.1} parent=31 // pred_region
          %208 = dma.done %s201, 512
        $region36: #{tpu_custom_call.1} parent=31 // pred_fallthru
          _
        // Predicated region
        $region37: #{tpu_custom_call.1} parent=31 // pred_check
          %p209 = pneg %p77
        $region38: #{tpu_custom_call.1} parent=31 // pred_check_branch
          %211 = sbr.rel (%p209) target = $region40
        $region39: #{tpu_custom_call.1} parent=31 // pred_region
          %212 = dma.done [#allocation6], 64
        $region40: #{tpu_custom_call.1} parent=31 // pred_fallthru
          _
        // Predicated region
        $region41: #{tpu_custom_call.1} parent=31 // pred_check
          %p213 = pneg %p98
        $region42: #{tpu_custom_call.1} parent=31 // pred_check_branch
          %215 = sbr.rel (%p213) target = $region44
        $region43: #{tpu_custom_call.1} parent=31 // pred_region
          %216 = dma.done [#allocation6], 64
        $region44: #{tpu_custom_call.1} parent=31 // pred_fallthru
          _
        %s217 = sand.u32 %s43, 1
        %s218 = scalar_lea.sflag [#allocation3], %s217
        %s219 = sand.u32 %s43, 1
        %s220 = smul.addr %s219, 32
        %s221 = scalar_lea.vmem [#allocation2], %s220
        %p222 = pneg %p56
        %p223 = pneg %p53
        %p224 = pneg %p77
        %p225 = pneg %p74
        %p226 = pneg %p98
        %p227 = pneg %p95
        %p228 = pneg %p126
        %p229 = pneg %p123
        %s230 = sand.u32 %s113, 1
        %s231 = scalar_lea.sflag [#allocation4], %s230
        %s232 = sand.u32 %s113, 1
        %s233 = smul.addr %s232, 32
        %s234 = scalar_lea.vmem [#allocation8], %s233
        %v235 = vld [vmem:[%s204] sm:$0xff]
        %v236 = vld [vmem:[%s204 + $0x8] sm:$0xff]
        %v237 = vld [vmem:[%s204 + $0x10] sm:$0xff]
        %v238 = vld [vmem:[%s204 + $0x18] sm:$0xff]
        %v239 = vadd.f32 %v235, %v236
        %v240 = vadd.f32 %v239, %v237
        %v241 = vadd.f32 %v240, %v238
        %v242 = vlaneseq
        %v243 = vand.u32 %v242, 127
        %vm244 = vcmp.ge.s32.totalorder %v243, 0
        %vm245 = vcmp.lt.s32.totalorder %v243, 16
        %vm246 = vmand %vm244, %vm245
        %v247 = vsel %vm246, %v241, 0.0
        %248 = vadd.xlane.f32.xlu0 %v247
        %v249 = vpop.xlane.xlu0 %248
        %v250 = vmul.f32 %v249, 0.015625
        %v251 = vsel %vm246, %v250, 0.0
        %vm252 = vcmp.ge.s32.totalorder %v243, 16
        %vm253 = vcmp.lt.s32.totalorder %v243, 32
        %vm254 = vmand %vm252, %vm253
        %v255 = vsel %vm254, %v241, 0.0
        %256 = vadd.xlane.f32.xlu0 %v255
        %v257 = vpop.xlane.xlu0 %256
        %v258 = vmul.f32 %v257, 0.015625
        %v259 = vsel %vm254, %v258, %v251
        %vm260 = vcmp.ge.s32.totalorder %v243, 32
        %vm261 = vcmp.lt.s32.totalorder %v243, 48
        %vm262 = vmand %vm260, %vm261
        %v263 = vsel %vm262, %v241, 0.0
        %264 = vadd.xlane.f32.xlu0 %v263
        %v265 = vpop.xlane.xlu0 %264
        %v266 = vmul.f32 %v265, 0.015625
        %v267 = vsel %vm262, %v266, %v259
        %vm268 = vcmp.ge.s32.totalorder %v243, 48
        %vm269 = vcmp.lt.s32.totalorder %v243, 64
        %vm270 = vmand %vm268, %vm269
        %v271 = vsel %vm270, %v241, 0.0
        %272 = vadd.xlane.f32.xlu0 %v271
        %v273 = vpop.xlane.xlu0 %272
        %v274 = vmul.f32 %v273, 0.015625
        %v275 = vsel %vm270, %v274, %v267
        %vm276 = vcmp.ge.s32.totalorder %v243, 64
        %vm277 = vcmp.lt.s32.totalorder %v243, 80
        %vm278 = vmand %vm276, %vm277
        %v279 = vsel %vm278, %v241, 0.0
        %280 = vadd.xlane.f32.xlu0 %v279
        %v281 = vpop.xlane.xlu0 %280
        %v282 = vmul.f32 %v281, 0.015625
        %v283 = vsel %vm278, %v282, %v275
        %vm284 = vcmp.ge.s32.totalorder %v243, 80
        %vm285 = vcmp.lt.s32.totalorder %v243, 96
        %vm286 = vmand %vm284, %vm285
        %v287 = vsel %vm286, %v241, 0.0
        %288 = vadd.xlane.f32.xlu0 %v287
        %v289 = vpop.xlane.xlu0 %288
        %v290 = vmul.f32 %v289, 0.015625
        %v291 = vsel %vm286, %v290, %v283
        %vm292 = vcmp.ge.s32.totalorder %v243, 96
        %vm293 = vcmp.lt.s32.totalorder %v243, 112
        %vm294 = vmand %vm292, %vm293
        %v295 = vsel %vm294, %v241, 0.0
        %296 = vadd.xlane.f32.xlu0 %v295
        %v297 = vpop.xlane.xlu0 %296
        %v298 = vmul.f32 %v297, 0.015625
        %v299 = vsel %vm294, %v298, %v291
        %vm300 = vcmp.ge.s32.totalorder %v243, 112
        %vm301 = vcmp.lt.s32.totalorder %v243, 128
        %vm302 = vmand %vm300, %vm301
        %v303 = vsel %vm302, %v241, 0.0
        %304 = vadd.xlane.f32.xlu0 %v303
        %v305 = vpop.xlane.xlu0 %304
        %v306 = vmul.f32 %v305, 0.015625
        %v307 = vsel %vm302, %v306, %v299
        %v308 = vsub.f32 %v235, %v307
        %v309 = vsub.f32 %v236, %v307
        %v310 = vsub.f32 %v237, %v307
        %v311 = vsub.f32 %v238, %v307
        %v312 = vmul.f32 %v308, %v308
        %v313 = vmul.f32 %v309, %v309
        %v314 = vmul.f32 %v310, %v310
        %v315 = vmul.f32 %v311, %v311
        %v316 = vadd.f32 %v312, %v313
        %v317 = vadd.f32 %v316, %v314
        %v318 = vadd.f32 %v317, %v315
        %v319 = vsel %vm246, %v318, 0.0
        %320 = vadd.xlane.f32.xlu0 %v319
        %v321 = vpop.xlane.xlu0 %320
        %v322 = vmul.f32 %v321, 0.015625
        %v323 = vadd.f32 %v322, 1e-05
        %v324 = vrsqrt.pop %v323
        %v325 = vsel %vm246, %v324, 0.0
        %v326 = vsel %vm254, %v318, 0.0
        %327 = vadd.xlane.f32.xlu0 %v326
        %v328 = vpop.xlane.xlu0 %327
        %v329 = vmul.f32 %v328, 0.015625
        %v330 = vadd.f32 %v329, 1e-05
        %v331 = vrsqrt.pop %v330
        %v332 = vsel %vm254, %v331, %v325
        %v333 = vsel %vm262, %v318, 0.0
        %334 = vadd.xlane.f32.xlu0 %v333
        %v335 = vpop.xlane.xlu0 %334
        %v336 = vmul.f32 %v335, 0.015625
        %v337 = vadd.f32 %v336, 1e-05
        %v338 = vrsqrt.pop %v337
        %v339 = vsel %vm262, %v338, %v332
        %v340 = vsel %vm270, %v318, 0.0
        %341 = vadd.xlane.f32.xlu0 %v340
        %v342 = vpop.xlane.xlu0 %341
        %v343 = vmul.f32 %v342, 0.015625
        %v344 = vadd.f32 %v343, 1e-05
        %v345 = vrsqrt.pop %v344
        %v346 = vsel %vm270, %v345, %v339
        %v347 = vsel %vm278, %v318, 0.0
        %348 = vadd.xlane.f32.xlu0 %v347
        %v349 = vpop.xlane.xlu0 %348
        %v350 = vmul.f32 %v349, 0.015625
        %v351 = vadd.f32 %v350, 1e-05
        %v352 = vrsqrt.pop %v351
        %v353 = vsel %vm278, %v352, %v346
        %v354 = vsel %vm286, %v318, 0.0
        %355 = vadd.xlane.f32.xlu0 %v354
        %v356 = vpop.xlane.xlu0 %355
        %v357 = vmul.f32 %v356, 0.015625
        %v358 = vadd.f32 %v357, 1e-05
        %v359 = vrsqrt.pop %v358
        %v360 = vsel %vm286, %v359, %v353
        %v361 = vsel %vm294, %v318, 0.0
        %362 = vadd.xlane.f32.xlu0 %v361
        %v363 = vpop.xlane.xlu0 %362
        %v364 = vmul.f32 %v363, 0.015625
        %v365 = vadd.f32 %v364, 1e-05
        %v366 = vrsqrt.pop %v365
        %v367 = vsel %vm294, %v366, %v360
        %v368 = vsel %vm302, %v318, 0.0
        %369 = vadd.xlane.f32.xlu0 %v368
        %v370 = vpop.xlane.xlu0 %369
        %v371 = vmul.f32 %v370, 0.015625
        %v372 = vadd.f32 %v371, 1e-05
        %v373 = vrsqrt.pop %v372
        %v374 = vsel %vm302, %v373, %v367
        %v375 = vld [vmem:[#allocation5] sm:$0x1]
        %v376 = vld [vmem:[#allocation5 + $0x1] sm:$0x1]
        %v377 = vld [vmem:[#allocation5 + $0x2] sm:$0x1]
        %v378 = vld [vmem:[#allocation5 + $0x3] sm:$0x1]
        %v379 = vld [vmem:[#allocation7] sm:$0x1]
        %v380 = vld [vmem:[#allocation7 + $0x1] sm:$0x1]
        %v381 = vld [vmem:[#allocation7 + $0x2] sm:$0x1]
        %v382 = vld [vmem:[#allocation7 + $0x3] sm:$0x1]
        %v383 = vmul.f32 %v308, %v374
        %v384 = vmul.f32 %v309, %v374
        %v385 = vmul.f32 %v310, %v374
        %v386 = vmul.f32 %v311, %v374
        %v391 = vlaneseq
        %v392 = vshrl.u32 %v391, 7
        %v393 = vsub.s32 0, %v392
        %v394 = vrot.slane %v375, %v393
        %v395 = vlaneseq
        %v396 = vshrl.u32 %v395, 7
        %v397 = vsub.s32 0, %v396
        %v398 = vrot.slane %v376, %v397
        %v399 = vlaneseq
        %v400 = vshrl.u32 %v399, 7
        %v401 = vsub.s32 0, %v400
        %v402 = vrot.slane %v377, %v401
        %v403 = vlaneseq
        %v404 = vshrl.u32 %v403, 7
        %v405 = vsub.s32 0, %v404
        %v406 = vrot.slane %v378, %v405
        %v411 = vmul.f32 %v383, %v394
        %v412 = vmul.f32 %v384, %v398
        %v413 = vmul.f32 %v385, %v402
        %v414 = vmul.f32 %v386, %v406
        %v419 = vlaneseq
        %v420 = vshrl.u32 %v419, 7
        %v421 = vsub.s32 0, %v420
        %v422 = vrot.slane %v379, %v421
        %v423 = vlaneseq
        %v424 = vshrl.u32 %v423, 7
        %v425 = vsub.s32 0, %v424
        %v426 = vrot.slane %v380, %v425
        %v427 = vlaneseq
        %v428 = vshrl.u32 %v427, 7
        %v429 = vsub.s32 0, %v428
        %v430 = vrot.slane %v381, %v429
        %v431 = vlaneseq
        %v432 = vshrl.u32 %v431, 7
        %v433 = vsub.s32 0, %v432
        %v434 = vrot.slane %v382, %v433
        %v439 = vadd.f32 %v411, %v422
        %v440 = vadd.f32 %v412, %v426
        %v441 = vadd.f32 %v413, %v430
        %v442 = vadd.f32 %v414, %v434
        %443 = vst [vmem:[%s234] sm:$0xff] %v439
        %444 = vst [vmem:[%s234 + $0x8] sm:$0xff] %v440
        %445 = vst [vmem:[%s234 + $0x10] sm:$0xff] %v441
        %446 = vst [vmem:[%s234 + $0x18] sm:$0xff] %v442
        %s447 = sand.u32 %s113, 1
        %s448 = scalar_lea.sflag [#allocation4], %s447
        %s449 = sand.u32 %s113, 1
        %s450 = smul.addr %s449, 32
        %s451 = scalar_lea.vmem [#allocation8], %s450
        // Predicated region
        $region45: #{tpu_custom_call.1} parent=31 // pred_check
          %p452 = pneg %p123
        $region46: #{tpu_custom_call.1} parent=31 // pred_check_branch
          %454 = sbr.rel (%p452) target = $region48
        $region47: #{tpu_custom_call.1} parent=31 // pred_region
          %s456 = ssub.s32 512, 512
          %457 = vsyncadd %s448, %s456
          %s458 = smul.addr %s25, 4
          %s459 = sadd.s32 %s26, %s458
          %s460 = smul.addr %s459, 128
          %s461 = scalar_lea.hbm %s3, %s460
          %s462 = sshll.u32 %s451, 4
          %s463 = int_to_ptr.vmem [resolvable:$true] %s462
          %468 = dma.vmem_to_hbm [thread:$0]  %s463, 512, %s461, %s448, 128, 128, 8
        $region48: #{tpu_custom_call.1} parent=31 // pred_fallthru
          _
      $region32: #{tpu_custom_call.1} parent=5 // pred_fallthru
        _
      %p469 = scmp.le.s32.totalorder 2, %s16
      // Predicated region
      $region49: #{tpu_custom_call.1} parent=5 // pred_check
        %p470 = pneg %p469
      $region50: #{tpu_custom_call.1} parent=5 // pred_check_branch
        %472 = sbr.rel (%p470) target = $region52
      $region51: #{tpu_custom_call.1} parent=5 // pred_region
        %s473 = ssub.s32 %s16, 2
        // Predicated region
        $region53: #{tpu_custom_call.1} parent=51 // pred_check
          %p474 = pneg %p129
        $region54: #{tpu_custom_call.1} parent=51 // pred_check_branch
          %476 = sbr.rel (%p474) target = $region56
        $region55: #{tpu_custom_call.1} parent=51 // pred_region
          %s477 = sand.u32 %s114, 1
          %s478 = scalar_lea.sflag [#allocation4], %s477
          %s479 = sand.u32 %s114, 1
          %s480 = smul.addr %s479, 32
          %s481 = scalar_lea.vmem [#allocation8], %s480
          %482 = dma.done %s478, 512
        $region56: #{tpu_custom_call.1} parent=51 // pred_fallthru
          _
      $region52: #{tpu_custom_call.1} parent=5 // pred_fallthru
        _
    $region6: #{tpu_custom_call.1} parent=1 // loop_footer
      %s20 = sadd.s32 1, %s16
    $region7: #{tpu_custom_call.1} parent=1 // loop_footer_branch
      %15 = sbr.rel target = $region3
    $region8: #{tpu_custom_call.1} parent=1 // loop_exit
      _
    %483 = vsyncpa [#allocation3], 1
    %s484 = scalar_lea.sflag [#allocation3], 1
    %485 = vsyncpa %s484, 1
    %486 = vsyncpa [#allocation6], 1
    %487 = vsyncpa [#allocation4], 1
    %s488 = scalar_lea.sflag [#allocation4], 1
    %489 = vsyncpa %s488, 1

</llo_original>
